<compile_context>
chip_gen: v7x
topology: tpu7x:2x2x1
jax: 0.10.0
libtpu: 0.0.40
codegen_flags: <defaults>
</compile_context>

<pallas_src>
import jax
import jax.numpy as jnp
from jax.experimental import pallas as pl
from jax.experimental.pallas import tpu as pltpu


def _bernoulli_skip_kernel(w_ref, b_ref, x_ref, o_ref):
    """o = ReLU(W @ x + b) over one dense (C, S_tile, L) spatial block.

    w_ref: (C, C)         SMEM  1x1-conv weight (possibly pre-scaled by p)
    b_ref: (C,)           SMEM  bias            (possibly pre-scaled by p)
    x_ref: (C, S_tile, L) VMEM  activation block (dense spatial minor dims)
    o_ref: (C, S_tile, L) VMEM  output block
    """
    c = x_ref.shape[0]
    # Load each input-channel slab once; accumulate in f32 even for bf16 I/O.
    x = [x_ref[ci].astype(jnp.float32) for ci in range(c)]
    # TODO(synk): for C >= ~32 this O(C^2) VPU path should switch to an MXU
    # jnp.dot (with C laid out on sublanes); for C=4 the VPU path is right.
    for co in range(c):
        acc = x[0] * w_ref[co, 0] + b_ref[co]          # bias folded into 1st FMA
        for ci in range(1, c):
            acc = acc + x[ci] * w_ref[co, ci]
        o_ref[co] = jnp.maximum(acc, 0.0).astype(o_ref.dtype)


def _choose_tiling(hw: int, c: int, dtype_bytes: int,
                   target_block_bytes: int = 1 << 20,
                   max_lane: int = 1024):
    """Pick (S, L, S_tile) with HW = S*L, L % 128 == 0 if possible, and
    C * S_tile * L * dtype_bytes near the target block size."""
    # Lane dim L: largest multiple-of-128 divisor of HW, capped at max_lane.
    l = 0
    t = min(max_lane, (hw // 128) * 128)
    while t >= 128:
        if hw % t == 0:
            l = t
            break
        t -= 128
    if l == 0:
        # TODO(synk): ragged HW with no /128 divisor needs a masked last tile;
        # fall back to one full-HW lane block (legal, just sublane-padded).
        l = hw
    s = hw // l

    # Sublane tile S_tile: multiple-of-8 divisor of S (or S itself), sized so
    # the block stays near the byte target.
    max_stile = max(1, target_block_bytes // (c * l * dtype_bytes))
    if s <= max_stile:
        s_tile = s
    else:
        s_tile = 0
        t = (min(s, max_stile) // 8) * 8
        while t >= 8:
            if s % t == 0:
                s_tile = t
                break
            t -= 8
        if s_tile == 0:
            # TODO(synk): no multiple-of-8 divisor fits the budget; fall back to
            # the full S block (legal; may need vmem_limit_bytes for huge HW).
            s_tile = s
    return s, l, s_tile


def _run_f(x_ncsl, w32, b32, s_tile):
    """Pallas launch of y = ReLU(conv1x1(x)) over an (N, C, S, L) activation."""
    n, c, s, l = x_ncsl.shape
    grid = (n, s // s_tile)
    return pl.pallas_call(
        _bernoulli_skip_kernel,
        out_shape=jax.ShapeDtypeStruct((n, c, s, l), x_ncsl.dtype),
        grid=grid,
        in_specs=[
            pl.BlockSpec(memory_space=pltpu.MemorySpace.SMEM),   # w (C, C)
            pl.BlockSpec(memory_space=pltpu.MemorySpace.SMEM),   # b (C,)
            pl.BlockSpec((pl.Squeezed(), c, s_tile, l),
                         lambda i, j: (i, 0, j, 0)),             # x block
        ],
        out_specs=pl.BlockSpec((pl.Squeezed(), c, s_tile, l),
                               lambda i, j: (i, 0, j, 0)),
        compiler_params=pltpu.CompilerParams(
            dimension_semantics=("parallel", "parallel")),
    )(w32, b32, x_ncsl)


def bernoulli_skip_forward(x_nchw, w, b, p, *, training=False, key=None):
    """BernoulliSkip.forward with f = Conv2d(C, C, 1) + ReLU.

    x_nchw: (N, C, H, W) activations (f32 or bf16; accumulation is f32)
    w:      (C_out, C_in) squeezed 1x1-conv weight
    b:      (C_out,)      bias
    p:      python float keep probability (>= 0; enables eval-mode p-folding)
    """
    n, c, h, wd = x_nchw.shape
    hw = h * wd
    s, l, s_tile = _choose_tiling(hw, c, jnp.dtype(x_nchw.dtype).itemsize)
    # TODO(synk): when W % 128 != 0 this view change may insert an XLA relayout
    # copy around the pallas_call; callers chaining such layers should keep the
    # (N, C, S, L) flat layout across layers to avoid paying it per layer.
    x = x_nchw.reshape(n, c, s, l)

    def run(w_eff, b_eff):
        out = _run_f(x, w_eff.astype(jnp.float32), b_eff.astype(jnp.float32),
                     s_tile)
        return out.reshape(n, c, h, wd)

    if training:
        assert key is not None
        gate = jax.random.bernoulli(key, p, ())
        # Dropped step: skip the kernel (no read / compute traffic) and return
        # zeros (PyTorch returns scalar 0; equivalent under +).  The zeros are
        # still one HBM write pass.
        return jax.lax.cond(
            gate,
            lambda: run(w, b),
            lambda: jnp.zeros((n, c, h, wd), x_nchw.dtype),
        )
    # Eval: fold p into the parameters (valid only for p >= 0), removing the
    # scale operand and the per-tile multiply from the kernel.
    assert p >= 0.0, "eval-mode p-folding requires p >= 0"
    pf = jnp.asarray(p, dtype=jnp.float32)
    return run(pf * w.astype(jnp.float32), pf * b.astype(jnp.float32))


def _reference(x_nchw, w, b, p, *, training=False, gate=None):
    y = jnp.einsum("nchw,oc->nohw", x_nchw, w) + b[None, :, None, None]
    y = jnp.maximum(y, 0.0)
    if training:
        return jnp.where(gate, y, jnp.zeros_like(y))
    return p * y


if __name__ == "__main__":
    key = jax.random.PRNGKey(0)
    kx, kw, kb, kg = jax.random.split(key, 4)

    N, C, H, W = 2, 4, 16, 16
    p = 0.7
    x = jax.random.normal(kx, (N, C, H, W), dtype=jnp.float32)
    # deterministic parameter init for f = Conv2d(C, C, 1) + ReLU
    w = jax.random.normal(kw, (C, C), dtype=jnp.float32) * 0.1
    b = jax.random.normal(kb, (C,), dtype=jnp.float32) * 0.1

    # eval mode: p * f(x)
    out_eval = jax.block_until_ready(
        bernoulli_skip_forward(x, w, b, p, training=False))
    ref_eval = _reference(x, w, b, p, training=False)
    assert jnp.allclose(out_eval, ref_eval, atol=1e-5, rtol=1e-5)

    # training mode: Bernoulli(p) gate -> f(x) or zeros
    out_train = jax.block_until_ready(
        bernoulli_skip_forward(x, w, b, p, training=True, key=kg))
    gate = jax.random.bernoulli(kg, p, ())
    ref_train = _reference(x, w, b, p, training=True, gate=gate)
    assert jnp.allclose(out_train, ref_train, atol=1e-5, rtol=1e-5)

    print("KERNEL_OK")
</pallas_src>

<mosaic_0001>
module attributes {stable_mosaic.version = 11 : i64} {
  func.func @_bernoulli_skip_kernel(%arg0: i32, %arg1: i32, %arg2: memref<4x4xf32, #tpu.memory_space<smem>>, %arg3: memref<4xf32, #tpu.memory_space<smem>>, %arg4: memref<1x4x1x256xf32, #tpu.memory_space<vmem>>, %arg5: memref<1x4x1x256xf32, #tpu.memory_space<vmem>>) attributes {dimension_semantics = [#tpu.dimension_semantics<parallel>, #tpu.dimension_semantics<parallel>], iteration_bounds = array<i64: 2, 1>, scalar_prefetch = 0 : i64, scratch_operands = 0 : i64, tpu.core_type = #tpu.core_type<tc>, window_params = [{transform_indices = @transform_0, window_bounds = array<i64: 4, 4>}, {transform_indices = @transform_1, window_bounds = array<i64: 4>}, {transform_indices = @transform_2, window_bounds = array<i64: 1, 4, 1, 256>}, {transform_indices = @transform_3, window_bounds = array<i64: 1, 4, 1, 256>}]} {
    %c0 = arith.constant 0 : index
    %c0_0 = arith.constant 0 : index
    %c0_1 = arith.constant 0 : index
    %c0_2 = arith.constant 0 : index
    %0 = vector.load %arg4[%c0, %c0_0, %c0_1, %c0_2] : memref<1x4x1x256xf32, #tpu.memory_space<vmem>>, vector<1x1x1x256xf32>
    %1 = vector.shape_cast %0 : vector<1x1x1x256xf32> to vector<1x256xf32>
    %c0_3 = arith.constant 0 : index
    %c1 = arith.constant 1 : index
    %c0_4 = arith.constant 0 : index
    %c0_5 = arith.constant 0 : index
    %2 = vector.load %arg4[%c0_3, %c1, %c0_4, %c0_5] : memref<1x4x1x256xf32, #tpu.memory_space<vmem>>, vector<1x1x1x256xf32>
    %3 = vector.shape_cast %2 : vector<1x1x1x256xf32> to vector<1x256xf32>
    %c0_6 = arith.constant 0 : index
    %c2 = arith.constant 2 : index
    %c0_7 = arith.constant 0 : index
    %c0_8 = arith.constant 0 : index
    %4 = vector.load %arg4[%c0_6, %c2, %c0_7, %c0_8] : memref<1x4x1x256xf32, #tpu.memory_space<vmem>>, vector<1x1x1x256xf32>
    %5 = vector.shape_cast %4 : vector<1x1x1x256xf32> to vector<1x256xf32>
    %c0_9 = arith.constant 0 : index
    %c3 = arith.constant 3 : index
    %c0_10 = arith.constant 0 : index
    %c0_11 = arith.constant 0 : index
    %6 = vector.load %arg4[%c0_9, %c3, %c0_10, %c0_11] : memref<1x4x1x256xf32, #tpu.memory_space<vmem>>, vector<1x1x1x256xf32>
    %7 = vector.shape_cast %6 : vector<1x1x1x256xf32> to vector<1x256xf32>
    %c0_12 = arith.constant 0 : index
    %c0_13 = arith.constant 0 : index
    %8 = memref.load %arg2[%c0_12, %c0_13] : memref<4x4xf32, #tpu.memory_space<smem>>
    %9 = vector.broadcast %8 : f32 to vector<1x256xf32>
    %10 = arith.mulf %1, %9 : vector<1x256xf32>
    %c0_14 = arith.constant 0 : index
    %11 = memref.load %arg3[%c0_14] : memref<4xf32, #tpu.memory_space<smem>>
    %12 = vector.broadcast %11 : f32 to vector<1x256xf32>
    %13 = arith.addf %10, %12 : vector<1x256xf32>
    %c0_15 = arith.constant 0 : index
    %c1_16 = arith.constant 1 : index
    %14 = memref.load %arg2[%c0_15, %c1_16] : memref<4x4xf32, #tpu.memory_space<smem>>
    %15 = vector.broadcast %14 : f32 to vector<1x256xf32>
    %16 = arith.mulf %3, %15 : vector<1x256xf32>
    %17 = arith.addf %13, %16 : vector<1x256xf32>
    %c0_17 = arith.constant 0 : index
    %c2_18 = arith.constant 2 : index
    %18 = memref.load %arg2[%c0_17, %c2_18] : memref<4x4xf32, #tpu.memory_space<smem>>
    %19 = vector.broadcast %18 : f32 to vector<1x256xf32>
    %20 = arith.mulf %5, %19 : vector<1x256xf32>
    %21 = arith.addf %17, %20 : vector<1x256xf32>
    %c0_19 = arith.constant 0 : index
    %c3_20 = arith.constant 3 : index
    %22 = memref.load %arg2[%c0_19, %c3_20] : memref<4x4xf32, #tpu.memory_space<smem>>
    %23 = vector.broadcast %22 : f32 to vector<1x256xf32>
    %24 = arith.mulf %7, %23 : vector<1x256xf32>
    %25 = arith.addf %21, %24 : vector<1x256xf32>
    %cst = arith.constant 0.000000e+00 : f32
    %26 = vector.broadcast %cst : f32 to vector<1x256xf32>
    %27 = arith.maximumf %25, %26 : vector<1x256xf32>
    %c0_21 = arith.constant 0 : index
    %c0_22 = arith.constant 0 : index
    %c0_23 = arith.constant 0 : index
    %c0_24 = arith.constant 0 : index
    %28 = vector.load %arg5[%c0_21, %c0_22, %c0_23, %c0_24] : memref<1x4x1x256xf32, #tpu.memory_space<vmem>>, vector<1x1x1x256xf32>
    %29 = vector.shape_cast %28 : vector<1x1x1x256xf32> to vector<1x256xf32>
    %30 = vector.shape_cast %27 : vector<1x256xf32> to vector<1x1x1x256xf32>
    tpu.vector_store %arg5[%c0_21, %c0_22, %c0_23, %c0_24], %30 {strides = array<i32>} : memref<1x4x1x256xf32, #tpu.memory_space<vmem>>, vector<1x1x1x256xf32>,
    %c1_25 = arith.constant 1 : index
    %c0_26 = arith.constant 0 : index
    %31 = memref.load %arg2[%c1_25, %c0_26] : memref<4x4xf32, #tpu.memory_space<smem>>
    %32 = vector.broadcast %31 : f32 to vector<1x256xf32>
    %33 = arith.mulf %1, %32 : vector<1x256xf32>
    %c1_27 = arith.constant 1 : index
    %34 = memref.load %arg3[%c1_27] : memref<4xf32, #tpu.memory_space<smem>>
    %35 = vector.broadcast %34 : f32 to vector<1x256xf32>
    %36 = arith.addf %33, %35 : vector<1x256xf32>
    %c1_28 = arith.constant 1 : index
    %c1_29 = arith.constant 1 : index
    %37 = memref.load %arg2[%c1_28, %c1_29] : memref<4x4xf32, #tpu.memory_space<smem>>
    %38 = vector.broadcast %37 : f32 to vector<1x256xf32>
    %39 = arith.mulf %3, %38 : vector<1x256xf32>
    %40 = arith.addf %36, %39 : vector<1x256xf32>
    %c1_30 = arith.constant 1 : index
    %c2_31 = arith.constant 2 : index
    %41 = memref.load %arg2[%c1_30, %c2_31] : memref<4x4xf32, #tpu.memory_space<smem>>
    %42 = vector.broadcast %41 : f32 to vector<1x256xf32>
    %43 = arith.mulf %5, %42 : vector<1x256xf32>
    %44 = arith.addf %40, %43 : vector<1x256xf32>
    %c1_32 = arith.constant 1 : index
    %c3_33 = arith.constant 3 : index
    %45 = memref.load %arg2[%c1_32, %c3_33] : memref<4x4xf32, #tpu.memory_space<smem>>
    %46 = vector.broadcast %45 : f32 to vector<1x256xf32>
    %47 = arith.mulf %7, %46 : vector<1x256xf32>
    %48 = arith.addf %44, %47 : vector<1x256xf32>
    %cst_34 = arith.constant 0.000000e+00 : f32
    %49 = vector.broadcast %cst_34 : f32 to vector<1x256xf32>
    %50 = arith.maximumf %48, %49 : vector<1x256xf32>
    %c0_35 = arith.constant 0 : index
    %c1_36 = arith.constant 1 : index
    %c0_37 = arith.constant 0 : index
    %c0_38 = arith.constant 0 : index
    %51 = vector.load %arg5[%c0_35, %c1_36, %c0_37, %c0_38] : memref<1x4x1x256xf32, #tpu.memory_space<vmem>>, vector<1x1x1x256xf32>
    %52 = vector.shape_cast %51 : vector<1x1x1x256xf32> to vector<1x256xf32>
    %53 = vector.shape_cast %50 : vector<1x256xf32> to vector<1x1x1x256xf32>
    tpu.vector_store %arg5[%c0_35, %c1_36, %c0_37, %c0_38], %53 {strides = array<i32>} : memref<1x4x1x256xf32, #tpu.memory_space<vmem>>, vector<1x1x1x256xf32>,
    %c2_39 = arith.constant 2 : index
    %c0_40 = arith.constant 0 : index
    %54 = memref.load %arg2[%c2_39, %c0_40] : memref<4x4xf32, #tpu.memory_space<smem>>
    %55 = vector.broadcast %54 : f32 to vector<1x256xf32>
    %56 = arith.mulf %1, %55 : vector<1x256xf32>
    %c2_41 = arith.constant 2 : index
    %57 = memref.load %arg3[%c2_41] : memref<4xf32, #tpu.memory_space<smem>>
    %58 = vector.broadcast %57 : f32 to vector<1x256xf32>
    %59 = arith.addf %56, %58 : vector<1x256xf32>
    %c2_42 = arith.constant 2 : index
    %c1_43 = arith.constant 1 : index
    %60 = memref.load %arg2[%c2_42, %c1_43] : memref<4x4xf32, #tpu.memory_space<smem>>
    %61 = vector.broadcast %60 : f32 to vector<1x256xf32>
    %62 = arith.mulf %3, %61 : vector<1x256xf32>
    %63 = arith.addf %59, %62 : vector<1x256xf32>
    %c2_44 = arith.constant 2 : index
    %c2_45 = arith.constant 2 : index
    %64 = memref.load %arg2[%c2_44, %c2_45] : memref<4x4xf32, #tpu.memory_space<smem>>
    %65 = vector.broadcast %64 : f32 to vector<1x256xf32>
    %66 = arith.mulf %5, %65 : vector<1x256xf32>
    %67 = arith.addf %63, %66 : vector<1x256xf32>
    %c2_46 = arith.constant 2 : index
    %c3_47 = arith.constant 3 : index
    %68 = memref.load %arg2[%c2_46, %c3_47] : memref<4x4xf32, #tpu.memory_space<smem>>
    %69 = vector.broadcast %68 : f32 to vector<1x256xf32>
    %70 = arith.mulf %7, %69 : vector<1x256xf32>
    %71 = arith.addf %67, %70 : vector<1x256xf32>
    %cst_48 = arith.constant 0.000000e+00 : f32
    %72 = vector.broadcast %cst_48 : f32 to vector<1x256xf32>
    %73 = arith.maximumf %71, %72 : vector<1x256xf32>
    %c0_49 = arith.constant 0 : index
    %c2_50 = arith.constant 2 : index
    %c0_51 = arith.constant 0 : index
    %c0_52 = arith.constant 0 : index
    %74 = vector.load %arg5[%c0_49, %c2_50, %c0_51, %c0_52] : memref<1x4x1x256xf32, #tpu.memory_space<vmem>>, vector<1x1x1x256xf32>
    %75 = vector.shape_cast %74 : vector<1x1x1x256xf32> to vector<1x256xf32>
    %76 = vector.shape_cast %73 : vector<1x256xf32> to vector<1x1x1x256xf32>
    tpu.vector_store %arg5[%c0_49, %c2_50, %c0_51, %c0_52], %76 {strides = array<i32>} : memref<1x4x1x256xf32, #tpu.memory_space<vmem>>, vector<1x1x1x256xf32>,
    %c3_53 = arith.constant 3 : index
    %c0_54 = arith.constant 0 : index
    %77 = memref.load %arg2[%c3_53, %c0_54] : memref<4x4xf32, #tpu.memory_space<smem>>
    %78 = vector.broadcast %77 : f32 to vector<1x256xf32>
    %79 = arith.mulf %1, %78 : vector<1x256xf32>
    %c3_55 = arith.constant 3 : index
    %80 = memref.load %arg3[%c3_55] : memref<4xf32, #tpu.memory_space<smem>>
    %81 = vector.broadcast %80 : f32 to vector<1x256xf32>
    %82 = arith.addf %79, %81 : vector<1x256xf32>
    %c3_56 = arith.constant 3 : index
    %c1_57 = arith.constant 1 : index
    %83 = memref.load %arg2[%c3_56, %c1_57] : memref<4x4xf32, #tpu.memory_space<smem>>
    %84 = vector.broadcast %83 : f32 to vector<1x256xf32>
    %85 = arith.mulf %3, %84 : vector<1x256xf32>
    %86 = arith.addf %82, %85 : vector<1x256xf32>
    %c3_58 = arith.constant 3 : index
    %c2_59 = arith.constant 2 : index
    %87 = memref.load %arg2[%c3_58, %c2_59] : memref<4x4xf32, #tpu.memory_space<smem>>
    %88 = vector.broadcast %87 : f32 to vector<1x256xf32>
    %89 = arith.mulf %5, %88 : vector<1x256xf32>
    %90 = arith.addf %86, %89 : vector<1x256xf32>
    %c3_60 = arith.constant 3 : index
    %c3_61 = arith.constant 3 : index
    %91 = memref.load %arg2[%c3_60, %c3_61] : memref<4x4xf32, #tpu.memory_space<smem>>
    %92 = vector.broadcast %91 : f32 to vector<1x256xf32>
    %93 = arith.mulf %7, %92 : vector<1x256xf32>
    %94 = arith.addf %90, %93 : vector<1x256xf32>
    %cst_62 = arith.constant 0.000000e+00 : f32
    %95 = vector.broadcast %cst_62 : f32 to vector<1x256xf32>
    %96 = arith.maximumf %94, %95 : vector<1x256xf32>
    %c0_63 = arith.constant 0 : index
    %c3_64 = arith.constant 3 : index
    %c0_65 = arith.constant 0 : index
    %c0_66 = arith.constant 0 : index
    %97 = vector.load %arg5[%c0_63, %c3_64, %c0_65, %c0_66] : memref<1x4x1x256xf32, #tpu.memory_space<vmem>>, vector<1x1x1x256xf32>
    %98 = vector.shape_cast %97 : vector<1x1x1x256xf32> to vector<1x256xf32>
    %99 = vector.shape_cast %96 : vector<1x256xf32> to vector<1x1x1x256xf32>
    tpu.vector_store %arg5[%c0_63, %c3_64, %c0_65, %c0_66], %99 {strides = array<i32>} : memref<1x4x1x256xf32, #tpu.memory_space<vmem>>, vector<1x1x1x256xf32>,
    return
  }
  func.func @transform_0(%arg0: i32, %arg1: i32) -> (i32, i32) {
    %c0_i32 = arith.constant 0 : i32
    %c0_i32_0 = arith.constant 0 : i32
    %c0_i32_1 = arith.constant 0 : i32
    return %c0_i32, %c0_i32_0 : i32, i32
  }
  func.func @transform_1(%arg0: i32, %arg1: i32) -> i32 {
    %c0_i32 = arith.constant 0 : i32
    %c0_i32_0 = arith.constant 0 : i32
    return %c0_i32 : i32
  }
  func.func @transform_2(%arg0: i32, %arg1: i32) -> (i32, i32, i32, i32) {
    %c0_i32 = arith.constant 0 : i32
    %c0_i32_0 = arith.constant 0 : i32
    %c0_i32_1 = arith.constant 0 : i32
    return %arg0, %c0_i32, %arg1, %c0_i32_0 : i32, i32, i32, i32
  }
  func.func @transform_3(%arg0: i32, %arg1: i32) -> (i32, i32, i32, i32) {
    %c0_i32 = arith.constant 0 : i32
    %c0_i32_0 = arith.constant 0 : i32
    %c0_i32_1 = arith.constant 0 : i32
    return %arg0, %c0_i32, %arg1, %c0_i32_0 : i32, i32, i32, i32
  }
}

</mosaic_0001>

<llo_original>
// kernel: tpu_custom_call.1
$region0: #{tpu_custom_call.1}
  #allocation0 [shape = 'u32[]', space=smem, size = 0x4, offset = 0x4, fixed_abs, tag = 'smem constant byte address 0x4 - core index']
  #allocation1 [shape = 'u32[144,128]{1,0:T(1,128)}', space=vmem, size = 0x12000, scoped, tag = 'internal scratch']
  %s0 = inlined_call_operand.hbm [shape: f32[4,4], index: 0, kind: input, shape index: {}]
  %s1 = inlined_call_operand.vmem [shape: f32[4], index: 1, kind: input, shape index: {}]
  %s2 = inlined_call_operand.hbm [shape: f32[2,4,1,256], index: 2, kind: input, shape index: {}]
  %s3 = inlined_call_operand.hbm [shape: f32[2,4,1,256], index: 3, kind: output, shape index: {}]
  %s4 = sld [smem:[#allocation0]]
  $region57: #{tpu_custom_call.1} parent=0
    _
  %s6 = ssub.s32 1, %s4
  %s7 = scalar_select 0, %s6, %s4
  $region1: #{tpu_custom_call.1} parent=0
    #allocation2 [shape = 'u8[2048]{0}', space=smem, size = 0x800, scoped, tag = 'input window, operand 0, single buffered']
    #allocation3 [shape = 's32[2]{0}', space=sflag, size = 0x8, scoped, tag = 'scoped memory for tpu_custom_call.1']
    #allocation4 [shape = 's32[2]{0}', space=sflag, size = 0x8, scoped, tag = 'scoped memory for tpu_custom_call.1']
    #allocation5 [shape = 's32[2]{0}', space=sflag, size = 0x8, scoped, tag = 'scoped memory for tpu_custom_call.1']
    #allocation6 [shape = 's32[2]{0}', space=sflag, size = 0x8, scoped, tag = 'scoped memory for tpu_custom_call.1']
    #allocation7 [shape = 'u8[512]{0}', space=smem, size = 0x200, scoped, tag = 'input window, operand 1, single buffered']
    #allocation8 [shape = 'u8[8192]{0}', space=vmem, size = 0x2000, scoped, tag = 'input window, operand 2']
    #allocation9 [shape = 'u8[8192]{0}', space=vmem, size = 0x2000, scoped, tag = 'output window, operand 0']
    %8 = vsyncpa [#allocation5], 0
    %9 = vsyncpa [#allocation6], 0
    %10 = vsyncpa [#allocation3], 0
    %s11 = scalar_lea.sflag [#allocation3], 1
    %12 = vsyncpa %s11, 0
    %13 = vsyncpa [#allocation4], 0
    %s14 = scalar_lea.sflag [#allocation4], 1
    %15 = vsyncpa %s14, 0
    loop: start=0, step=1, limit=4
    $region2: #{tpu_custom_call.1} parent=1 // loop_pre_header
      _
    $region3: #{tpu_custom_call.1} parent=1 // loop_header
      %s17 = sphi 0, %s21
      %p18 = scmp.ge.s32.totalorder %s17, 4
      %s24 = sphi 0, %s36
      %s25 = sphi 0, %s32
      %s26 = sphi 0, %s24
      %s27 = sphi 0, %s25
      %s28 = sphi 0, %s26
      %s29 = sphi 0, %s27
      %s37 = sphi 0, %s37
      %s39 = sphi 0, %s37
      %s40 = sphi 0, %s39
      %s54 = sphi 0, %s40
      %s58 = sphi 0, %s58
      %s60 = sphi 0, %s58
      %s61 = sphi 0, %s60
      %s75 = sphi 0, %s61
      %s83 = sphi 0, %s85
      %s86 = sphi 0, %s83
      %s87 = sphi 0, %s86
      %s103 = sphi 0, %s87
      %s111 = sphi 0, %s113
      %s114 = sphi 0, %s111
      %s115 = sphi 0, %s114
      %s131 = sphi 0, %s115
    $region4: #{tpu_custom_call.1} parent=1 // loop_header_branch
      %20 = sbr.rel (%p18) target = $region8
    $region5: #{tpu_custom_call.1} parent=1 // loop_body
      %s22 = ssub.s32 %s17, 1
      %s23 = ssub.s32 %s17, 2
      %s30 = sadd.s32 1, %s25
      %p31 = scmp.ge.s32.totalorder %s30, 1
      %s32 = scalar_select %p31, 0, %s30
      %s33 = sadd.s32 1, %s24
      %s34 = scalar_select %p31, %s33, %s24
      %p35 = scmp.ge.s32.totalorder %s34, 2
      %s36 = scalar_select %p35, 0, %s34
      %s38 = sadd.s32 %s37, 1
      %p41 = scmp.eq.s32.totalorder %s17, 1
      %p42 = scmp.ne.s32.totalorder %s37, %s39
      %p43 = scmp.eq.s32.totalorder %s17, 0
      %p44 = por %p42, %p43
      %p45 = scmp.ne.s32.totalorder %s37, %s39
      %p46 = scmp.eq.s32.totalorder %s22, 1
      %p47 = por %p45, %p46
      %p48 = scmp.ne.s32.totalorder %s39, %s40
      %p49 = scmp.eq.s32.totalorder %s22, 0
      %p50 = por %p48, %p49
      %p51 = scmp.ne.s32.totalorder %s39, %s40
      %p52 = scmp.eq.s32.totalorder %s23, 1
      %p53 = por %p51, %p52
      %p55 = scmp.ne.s32.totalorder %s40, %s54
      %p56 = scmp.eq.s32.totalorder %s23, 0
      %p57 = por %p55, %p56
      %s59 = sadd.s32 %s58, 1
      %p62 = scmp.eq.s32.totalorder %s17, 1
      %p63 = scmp.ne.s32.totalorder %s58, %s60
      %p64 = scmp.eq.s32.totalorder %s17, 0
      %p65 = por %p63, %p64
      %p66 = scmp.ne.s32.totalorder %s58, %s60
      %p67 = scmp.eq.s32.totalorder %s22, 1
      %p68 = por %p66, %p67
      %p69 = scmp.ne.s32.totalorder %s60, %s61
      %p70 = scmp.eq.s32.totalorder %s22, 0
      %p71 = por %p69, %p70
      %p72 = scmp.ne.s32.totalorder %s60, %s61
      %p73 = scmp.eq.s32.totalorder %s23, 1
      %p74 = por %p72, %p73
      %p76 = scmp.ne.s32.totalorder %s61, %s75
      %p77 = scmp.eq.s32.totalorder %s23, 0
      %p78 = por %p76, %p77
      %s79 = ssub.s32 %s24, %s36
      %s80 = ssub.s32 %s25, %s32
      %s81 = sor.u32 %s79, %s80
      %p82 = scmp.eq.s32.totalorder %s81, 0
      %s84 = sadd.s32 %s83, 1
      %s85 = scalar_select %p82, %s83, %s84
      %p88 = pneg %p82
      %p89 = scmp.eq.s32.totalorder %s17, 1
      %p90 = por %p88, %p89
      %p91 = scmp.ne.s32.totalorder %s83, %s86
      %p92 = scmp.eq.s32.totalorder %s17, 0
      %p93 = por %p91, %p92
      %p94 = scmp.ne.s32.totalorder %s83, %s86
      %p95 = scmp.eq.s32.totalorder %s22, 1
      %p96 = por %p94, %p95
      %p97 = scmp.ne.s32.totalorder %s86, %s87
      %p98 = scmp.eq.s32.totalorder %s22, 0
      %p99 = por %p97, %p98
      %p100 = scmp.ne.s32.totalorder %s86, %s87
      %p101 = scmp.eq.s32.totalorder %s23, 1
      %p102 = por %p100, %p101
      %p104 = scmp.ne.s32.totalorder %s87, %s103
      %p105 = scmp.eq.s32.totalorder %s23, 0
      %p106 = por %p104, %p105
      %s107 = ssub.s32 %s24, %s36
      %s108 = ssub.s32 %s25, %s32
      %s109 = sor.u32 %s107, %s108
      %p110 = scmp.eq.s32.totalorder %s109, 0
      %s112 = sadd.s32 %s111, 1
      %s113 = scalar_select %p110, %s111, %s112
      %p116 = pneg %p110
      %p117 = scmp.eq.s32.totalorder %s17, 1
      %p118 = por %p116, %p117
      %p119 = scmp.ne.s32.totalorder %s111, %s114
      %p120 = scmp.eq.s32.totalorder %s17, 0
      %p121 = por %p119, %p120
      %p122 = scmp.ne.s32.totalorder %s111, %s114
      %p123 = scmp.eq.s32.totalorder %s22, 1
      %p124 = por %p122, %p123
      %p125 = scmp.ne.s32.totalorder %s114, %s115
      %p126 = scmp.eq.s32.totalorder %s22, 0
      %p127 = por %p125, %p126
      %p128 = scmp.ne.s32.totalorder %s114, %s115
      %p129 = scmp.eq.s32.totalorder %s23, 1
      %p130 = por %p128, %p129
      %p132 = scmp.ne.s32.totalorder %s115, %s131
      %p133 = scmp.eq.s32.totalorder %s23, 0
      %p134 = por %p132, %p133
      %p135 = scmp.le.s32.totalorder 1, %s17
      %p136 = scmp.lt.s32.totalorder %s17, 3
      %p137 = pnand %p135, %p136
      %p138 = pneg %p137
      // Predicated region
      $region9: #{tpu_custom_call.1} parent=5 // pred_check
        _
      $region10: #{tpu_custom_call.1} parent=5 // pred_check_branch
        %140 = sbr.rel (%p137) target = $region12
      $region11: #{tpu_custom_call.1} parent=5 // pred_region
        %s141 = ssub.s32 %s17, 1
        // Predicated region
        $region13: #{tpu_custom_call.1} parent=11 // pred_check
          %p142 = pneg %p50
        $region14: #{tpu_custom_call.1} parent=11 // pred_check_branch
          %144 = sbr.rel (%p142) target = $region16
        $region15: #{tpu_custom_call.1} parent=11 // pred_region
          %s146 = ssub.s32 64, 64
          %147 = vsyncadd [#allocation5], %s146
          %150 = dma.hbm_to_smem %s0, 64, [#allocation2], [#allocation5]
        $region16: #{tpu_custom_call.1} parent=11 // pred_fallthru
          _
        // Predicated region
        $region17: #{tpu_custom_call.1} parent=11 // pred_check
          %p151 = pneg %p71
        $region18: #{tpu_custom_call.1} parent=11 // pred_check_branch
          %153 = sbr.rel (%p151) target = $region20
        $region19: #{tpu_custom_call.1} parent=11 // pred_region
          %s155 = ssub.s32 16, 16
          %156 = vsyncadd [#allocation6], %s155
          %s158 = sshll.u32 %s1, 4
          %s159 = int_to_ptr.vmem [resolvable:$true] %s158
          %161 = dma.vmem_to_smem %s159, 16, [#allocation7], [#allocation6]
        $region20: #{tpu_custom_call.1} parent=11 // pred_fallthru
          _
      $region12: #{tpu_custom_call.1} parent=5 // pred_fallthru
        _
      %p162 = scmp.lt.s32.totalorder %s17, 2
      // Predicated region
      $region21: #{tpu_custom_call.1} parent=5 // pred_check
        %p163 = pneg %p162
      $region22: #{tpu_custom_call.1} parent=5 // pred_check_branch
        %165 = sbr.rel (%p163) target = $region24
      $region23: #{tpu_custom_call.1} parent=5 // pred_region
        // Predicated region
        $region25: #{tpu_custom_call.1} parent=23 // pred_check
          %p166 = pneg %p93
        $region26: #{tpu_custom_call.1} parent=23 // pred_check_branch
          %168 = sbr.rel (%p166) target = $region28
        $region27: #{tpu_custom_call.1} parent=23 // pred_region
          %s169 = sand.u32 %s83, 1
          %s170 = scalar_lea.sflag [#allocation3], %s169
          %s171 = sand.u32 %s83, 1
          %s172 = smul.addr %s171, 8
          %s173 = scalar_lea.vmem [#allocation8], %s172
          %s175 = ssub.s32 128, 128
          %176 = vsyncadd %s170, %s175
          %s177 = smul.addr %s25, 2
          %s178 = smul.addr %s24, 8
          %s179 = sadd.s32 %s177, %s178
          %s180 = smul.addr %s179, 16
          %s181 = scalar_lea.hbm %s2, %s180
          %s182 = sshll.u32 %s173, 4
          %s183 = int_to_ptr.vmem [resolvable:$true] %s182
          %188 = dma.hbm_to_vmem [thread:$0]  %s181, 128, %s183, %s170, 32, 32, 2
        $region28: #{tpu_custom_call.1} parent=23 // pred_fallthru
          _
      $region24: #{tpu_custom_call.1} parent=5 // pred_fallthru
        _
      %p189 = scmp.le.s32.totalorder 1, %s17
      %p190 = scmp.lt.s32.totalorder %s17, 3
      %p191 = pnand %p189, %p190
      %p192 = pneg %p191
      // Predicated region
      $region29: #{tpu_custom_call.1} parent=5 // pred_check
        _
      $region30: #{tpu_custom_call.1} parent=5 // pred_check_branch
        %194 = sbr.rel (%p191) target = $region32
      $region31: #{tpu_custom_call.1} parent=5 // pred_region
        %s195 = ssub.s32 %s17, 1
        // Predicated region
        $region33: #{tpu_custom_call.1} parent=31 // pred_check
          %p196 = pneg %p50
        $region34: #{tpu_custom_call.1} parent=31 // pred_check_branch
          %198 = sbr.rel (%p196) target = $region36
        $region35: #{tpu_custom_call.1} parent=31 // pred_region
          %199 = dma.done [#allocation5], 64
        $region36: #{tpu_custom_call.1} parent=31 // pred_fallthru
          _
        // Predicated region
        $region37: #{tpu_custom_call.1} parent=31 // pred_check
          %p200 = pneg %p71
        $region38: #{tpu_custom_call.1} parent=31 // pred_check_branch
          %202 = sbr.rel (%p200) target = $region40
        $region39: #{tpu_custom_call.1} parent=31 // pred_region
          %203 = dma.done [#allocation6], 16
        $region40: #{tpu_custom_call.1} parent=31 // pred_fallthru
          _
        %s204 = sand.u32 %s86, 1
        %s205 = scalar_lea.sflag [#allocation3], %s204
        %s206 = sand.u32 %s86, 1
        %s207 = smul.addr %s206, 8
        %s208 = scalar_lea.vmem [#allocation8], %s207
        // Predicated region
        $region41: #{tpu_custom_call.1} parent=31 // pred_check
          %p209 = pneg %p99
        $region42: #{tpu_custom_call.1} parent=31 // pred_check_branch
          %211 = sbr.rel (%p209) target = $region44
        $region43: #{tpu_custom_call.1} parent=31 // pred_region
          %212 = dma.done %s205, 128
        $region44: #{tpu_custom_call.1} parent=31 // pred_fallthru
          _
        %213 = sfence
        %p214 = pneg %p50
        %p215 = pneg %p47
        %p216 = pneg %p71
        %p217 = pneg %p68
        %s218 = sand.u32 %s86, 1
        %s219 = scalar_lea.sflag [#allocation3], %s218
        %s220 = sand.u32 %s86, 1
        %s221 = smul.addr %s220, 8
        %s222 = scalar_lea.vmem [#allocation8], %s221
        %p223 = pneg %p99
        %p224 = pneg %p96
        %p225 = pneg %p127
        %p226 = pneg %p124
        %s227 = sand.u32 %s114, 1
        %s228 = scalar_lea.sflag [#allocation4], %s227
        %s229 = sand.u32 %s114, 1
        %s230 = smul.addr %s229, 8
        %s231 = scalar_lea.vmem [#allocation9], %s230
        %v232 = vld [vmem:[%s208] sm:$0x3]
        %s233 = scalar_lea.vmem %s208, 2 [#allocation8]
        %v234 = vld [vmem:[%s233] sm:$0x3]
        %s235 = scalar_lea.vmem %s208, 4 [#allocation8]
        %v236 = vld [vmem:[%s235] sm:$0x3]
        %s237 = scalar_lea.vmem %s208, 6 [#allocation8]
        %v238 = vld [vmem:[%s237] sm:$0x3]
        %s239 = sld [smem:[#allocation2]]
        %v240 = vstv %s239
        %v241 = vmul.f32 %v232, %v240
        %s242 = sld [smem:[#allocation7]]
        %v243 = vstv %s242
        %v244 = vadd.f32 %v241, %v243
        %s245 = sld [smem:[#allocation2 + $0x1]]
        %v246 = vstv %s245
        %v247 = vmul.f32 %v234, %v246
        %v248 = vadd.f32 %v244, %v247
        %s249 = sld [smem:[#allocation2 + $0x2]]
        %v250 = vstv %s249
        %v251 = vmul.f32 %v236, %v250
        %v252 = vadd.f32 %v248, %v251
        %s253 = sld [smem:[#allocation2 + $0x3]]
        %v254 = vstv %s253
        %v255 = vmul.f32 %v238, %v254
        %v256 = vadd.f32 %v252, %v255
        %v257 = vmax.f32 %v256, 0.0
        %v258 = vlaneseq
        %vm259 = vcmp.ge.s32.totalorder %v258, 0
        %vm260 = vcmp.lt.s32.totalorder %v258, 256
        %vm261 = vmand %vm259, %vm260
        %262 = vst.msk [vmem:[%s231] sm:$0x3] %vm261, %v257
        %s263 = sld [smem:[#allocation2 + $0x80]]
        %v264 = vstv %s263
        %v265 = vmul.f32 %v232, %v264
        %s266 = sld [smem:[#allocation7 + $0x1]]
        %v267 = vstv %s266
        %v268 = vadd.f32 %v265, %v267
        %s269 = sld [smem:[#allocation2 + $0x81]]
        %v270 = vstv %s269
        %v271 = vmul.f32 %v234, %v270
        %v272 = vadd.f32 %v268, %v271
        %s273 = sld [smem:[#allocation2 + $0x82]]
        %v274 = vstv %s273
        %v275 = vmul.f32 %v236, %v274
        %v276 = vadd.f32 %v272, %v275
        %s277 = sld [smem:[#allocation2 + $0x83]]
        %v278 = vstv %s277
        %v279 = vmul.f32 %v238, %v278
        %v280 = vadd.f32 %v276, %v279
        %v281 = vmax.f32 %v280, 0.0
        %s282 = scalar_lea.vmem %s231, 2 [#allocation9]
        %283 = vst.msk [vmem:[%s282] sm:$0x3] %vm261, %v281
        %s284 = sld [smem:[#allocation2 + $0x100]]
        %v285 = vstv %s284
        %v286 = vmul.f32 %v232, %v285
        %s287 = sld [smem:[#allocation7 + $0x2]]
        %v288 = vstv %s287
        %v289 = vadd.f32 %v286, %v288
        %s290 = sld [smem:[#allocation2 + $0x101]]
        %v291 = vstv %s290
        %v292 = vmul.f32 %v234, %v291
        %v293 = vadd.f32 %v289, %v292
        %s294 = sld [smem:[#allocation2 + $0x102]]
        %v295 = vstv %s294
        %v296 = vmul.f32 %v236, %v295
        %v297 = vadd.f32 %v293, %v296
        %s298 = sld [smem:[#allocation2 + $0x103]]
        %v299 = vstv %s298
        %v300 = vmul.f32 %v238, %v299
        %v301 = vadd.f32 %v297, %v300
        %v302 = vmax.f32 %v301, 0.0
        %s303 = scalar_lea.vmem %s231, 4 [#allocation9]
        %304 = vst.msk [vmem:[%s303] sm:$0x3] %vm261, %v302
        %s305 = sld [smem:[#allocation2 + $0x180]]
        %v306 = vstv %s305
        %v307 = vmul.f32 %v232, %v306
        %s308 = sld [smem:[#allocation7 + $0x3]]
        %v309 = vstv %s308
        %v310 = vadd.f32 %v307, %v309
        %s311 = sld [smem:[#allocation2 + $0x181]]
        %v312 = vstv %s311
        %v313 = vmul.f32 %v234, %v312
        %v314 = vadd.f32 %v310, %v313
        %s315 = sld [smem:[#allocation2 + $0x182]]
        %v316 = vstv %s315
        %v317 = vmul.f32 %v236, %v316
        %v318 = vadd.f32 %v314, %v317
        %s319 = sld [smem:[#allocation2 + $0x183]]
        %v320 = vstv %s319
        %v321 = vmul.f32 %v238, %v320
        %v322 = vadd.f32 %v318, %v321
        %v323 = vmax.f32 %v322, 0.0
        %s324 = scalar_lea.vmem %s231, 6 [#allocation9]
        %325 = vst.msk [vmem:[%s324] sm:$0x3] %vm261, %v323
        %s326 = sand.u32 %s114, 1
        %s327 = scalar_lea.sflag [#allocation4], %s326
        %s328 = sand.u32 %s114, 1
        %s329 = smul.addr %s328, 8
        %s330 = scalar_lea.vmem [#allocation9], %s329
        // Predicated region
        $region45: #{tpu_custom_call.1} parent=31 // pred_check
          %p331 = pneg %p124
        $region46: #{tpu_custom_call.1} parent=31 // pred_check_branch
          %333 = sbr.rel (%p331) target = $region48
        $region47: #{tpu_custom_call.1} parent=31 // pred_region
          %s335 = ssub.s32 128, 128
          %336 = vsyncadd %s327, %s335
          %s337 = smul.addr %s27, 2
          %s338 = smul.addr %s26, 8
          %s339 = sadd.s32 %s337, %s338
          %s340 = smul.addr %s339, 16
          %s341 = scalar_lea.hbm %s3, %s340
          %s342 = sshll.u32 %s330, 4
          %s343 = int_to_ptr.vmem [resolvable:$true] %s342
          %348 = dma.vmem_to_hbm [thread:$0]  %s343, 128, %s341, %s327, 32, 32, 2
        $region48: #{tpu_custom_call.1} parent=31 // pred_fallthru
          _
      $region32: #{tpu_custom_call.1} parent=5 // pred_fallthru
        _
      %p349 = scmp.le.s32.totalorder 2, %s17
      // Predicated region
      $region49: #{tpu_custom_call.1} parent=5 // pred_check
        %p350 = pneg %p349
      $region50: #{tpu_custom_call.1} parent=5 // pred_check_branch
        %352 = sbr.rel (%p350) target = $region52
      $region51: #{tpu_custom_call.1} parent=5 // pred_region
        %s353 = ssub.s32 %s17, 2
        // Predicated region
        $region53: #{tpu_custom_call.1} parent=51 // pred_check
          %p354 = pneg %p130
        $region54: #{tpu_custom_call.1} parent=51 // pred_check_branch
          %356 = sbr.rel (%p354) target = $region56
        $region55: #{tpu_custom_call.1} parent=51 // pred_region
          %s357 = sand.u32 %s115, 1
          %s358 = scalar_lea.sflag [#allocation4], %s357
          %s359 = sand.u32 %s115, 1
          %s360 = smul.addr %s359, 8
          %s361 = scalar_lea.vmem [#allocation9], %s360
          %362 = dma.done %s358, 128
        $region56: #{tpu_custom_call.1} parent=51 // pred_fallthru
          _
      $region52: #{tpu_custom_call.1} parent=5 // pred_fallthru
        _
    $region6: #{tpu_custom_call.1} parent=1 // loop_footer
      %s21 = sadd.s32 1, %s17
    $region7: #{tpu_custom_call.1} parent=1 // loop_footer_branch
      %16 = sbr.rel target = $region3
    $region8: #{tpu_custom_call.1} parent=1 // loop_exit
      _
    %363 = vsyncpa [#allocation3], 1
    %s364 = scalar_lea.sflag [#allocation3], 1
    %365 = vsyncpa %s364, 1
    %366 = vsyncpa [#allocation4], 1
    %s367 = scalar_lea.sflag [#allocation4], 1
    %368 = vsyncpa %s367, 1
    %369 = vsyncpa [#allocation5], 1
    %s370 = scalar_lea.sflag [#allocation5], 1
    %371 = vsyncpa %s370, 1
    %372 = vsyncpa [#allocation6], 1
    %s373 = scalar_lea.sflag [#allocation6], 1
    %374 = vsyncpa %s373, 1

</llo_original>
